<compile_context>
chip_gen: v7x
topology: tpu7x:2x2x1
jax: 0.10.0
libtpu: 0.0.40
codegen_flags: <defaults>
</compile_context>

<pallas_src>
import math
import functools

import jax
import jax.numpy as jnp
from jax import lax
from jax.experimental import pallas as pl
from jax.experimental.pallas import tpu as pltpu

# ---------------------------------------------------------------------------
# Configuration (synthetic, small)
# ---------------------------------------------------------------------------
N_IMG = 2            # batch
C_IN = 3             # input channels (RGB)
H_IN = 32
W_IN = 32
C_FEAT = 32          # backbone / rpn-head channels
NUM_ANCHORS = 3      # anchors per feature location
STRIDE = 2           # backbone total stride
ANCHOR_SIZES = (8.0, 16.0, 32.0)
PIXEL_MEAN = jnp.array([103.530, 116.280, 123.675], dtype=jnp.float32)
PIXEL_STD = jnp.array([1.0, 1.0, 1.0], dtype=jnp.float32)
SCALE_CLAMP = math.log(1000.0 / 16.0)
POST_TOPK = 50
K_BB_PAD = 32        # backbone im2col K padded 27 -> 32
HEAD_PAD = 128       # lane-dense padded width of the fused RPN head output
                     # (also equals 4 * C_FEAT used for backbone lane packing)


# ---------------------------------------------------------------------------
# Pallas kernels
# ---------------------------------------------------------------------------
def _backbone_matmul_kernel(cols_ref, w_ref, b_ref, o_ref):
    # cols: (tm, 128) bf16 — 4 spatial positions packed per row.
    # w:    (128, 128) bf16 block-diagonal (4 copies of the 32x32 folded conv).
    # One MXU matmul (f32 accumulate) + bias + ReLU; single lane-dense store.
    acc = jnp.dot(cols_ref[...], w_ref[...], preferred_element_type=jnp.float32)
    o_ref[...] = jnp.maximum(acc + b_ref[...], 0.0).astype(o_ref.dtype)


def _rpn_fused_kernel(feat_ref, ctr_ref, tab_ref, w_rpn_ref, b_rpn_ref,
                      w_ctr_ref, b_ctr_ref, w_wh_ref, b_wh_ref, o_ref, *,
                      hw_out, wp, c_feat, num_anchors):
    """Fused RPN for one image: 3x3 conv (9 row-shifted VMEM matmuls, no HBM
    im2col) -> lane-dense obj/box heads -> full-width anchor decode + clip ->
    one unmasked 128-wide store.

    Output columns: [obj(A) | x1(A) | y1(A) | x2(A) | y2(A) | zeros...].
    """
    # --- 3x3 RPN conv: flat padded feature rows, tap (dy,dx) == row shift
    #     dy*wp + dx.  All slices stay inside the VMEM block.
    acc = None
    for tap in range(9):
        dy, dx = divmod(tap, 3)
        off = dy * wp + dx
        x = feat_ref[pl.ds(off, hw_out), :]                  # (hw_out, c_feat)
        w = w_rpn_ref[pl.ds(tap * c_feat, c_feat), :]        # (c_feat, c_feat)
        d = jnp.dot(x, w, preferred_element_type=jnp.float32)
        acc = d if acc is None else acc + d
    t = jnp.maximum(acc + b_rpn_ref[...], 0.0)               # f32, ReLU

    # --- lane-dense heads (kept in f32; K=32 so the extra precision is free).
    #     center columns carry [obj | dx*size (x1,x2 slots) | dy*size (y1,y2)],
    #     whlog columns carry the matching dw/dh logits (+log size in the bias).
    center = jnp.dot(t, w_ctr_ref[...],
                     preferred_element_type=jnp.float32) + b_ctr_ref[...]
    whlog = jnp.dot(t, w_wh_ref[...],
                    preferred_element_type=jnp.float32) + b_wh_ref[...]

    clamp = tab_ref[0:1, :]   # SCALE_CLAMP + log(anchor size) per column
    limit = tab_ref[1:2, :]   # img_w at x columns, img_h at y columns
    sign = tab_ref[2:3, :]    # -0.5 (x1/y1 cols), +0.5 (x2/y2 cols), 0 elsewhere

    wh = jnp.exp(jnp.minimum(whlog, clamp))                  # EUP, full width
    boxes = jnp.clip(center + ctr_ref[...] + sign * wh, 0.0, limit)

    a = num_anchors
    col = lax.broadcasted_iota(jnp.int32, (1, HEAD_PAD), 1)
    out = jnp.where(col < a, center, jnp.where(col < 5 * a, boxes, 0.0))
    o_ref[...] = out                                         # single store


# ---------------------------------------------------------------------------
# Pallas wrappers
# ---------------------------------------------------------------------------
def pallas_backbone_conv(cols32, w_diag, b_tile, *, out_dtype=jnp.float32):
    """ReLU(cols32 @ W + b) with 4 spatial rows packed per 128-lane row.

    cols32: (M, 32) im2col rows (K already padded to 32).  Returns (M, 32)."""
    m, k = cols32.shape
    c_out = w_diag.shape[1] // 4
    pad4 = (-m) % 4
    if pad4:
        cols32 = jnp.pad(cols32, ((0, pad4), (0, 0)))
    m4 = (m + pad4) // 4
    cols4 = cols32.reshape(m4, 4 * k).astype(jnp.bfloat16)   # free reshape

    # >= 2 grid steps so both v7x TensorCores engage; large tiles otherwise.
    n_steps = max(2, pl.cdiv(m4, 512))
    tm = pl.cdiv(pl.cdiv(m4, n_steps), 8) * 8
    m4_pad = pl.cdiv(m4, tm) * tm
    if m4_pad != m4:
        cols4 = jnp.pad(cols4, ((0, m4_pad - m4), (0, 0)))

    cost = pl.CostEstimate(
        flops=2 * m4_pad * (4 * k) * (4 * c_out),
        transcendentals=0,
        bytes_accessed=(cols4.size * 2 + w_diag.size * 2 + b_tile.size * 4
                        + m4_pad * 4 * c_out * 4))
    out = pl.pallas_call(
        _backbone_matmul_kernel,
        out_shape=jax.ShapeDtypeStruct((m4_pad, 4 * c_out), out_dtype),
        grid=(m4_pad // tm,),
        in_specs=[
            pl.BlockSpec((tm, 4 * k), lambda i: (i, 0)),
            pl.BlockSpec((4 * k, 4 * c_out), lambda i: (0, 0)),
            pl.BlockSpec((1, 4 * c_out), lambda i: (0, 0)),
        ],
        out_specs=pl.BlockSpec((tm, 4 * c_out), lambda i: (i, 0)),
        compiler_params=pltpu.CompilerParams(
            dimension_semantics=("parallel",)),
        cost_estimate=cost,
    )(cols4, w_diag, b_tile)
    return out.reshape(m4_pad * 4, c_out)[:m]                # free unpack


def pallas_rpn_fused(feat_flat, ctr_tab, tab, w_rpn, b_rpn, w_ctr, b_ctr,
                     w_wh, b_wh, *, wp, hw_out):
    """Fused RPN conv + heads + anchor decode; grid = one image per step."""
    n, lf, c = feat_flat.shape
    kernel = functools.partial(_rpn_fused_kernel, hw_out=hw_out, wp=wp,
                               c_feat=c, num_anchors=NUM_ANCHORS)
    flops = n * (9 * 2 * hw_out * c * c + 2 * 2 * hw_out * c * HEAD_PAD)
    cost = pl.CostEstimate(
        flops=flops,
        transcendentals=n * hw_out * HEAD_PAD,
        bytes_accessed=(feat_flat.size * 4 + ctr_tab.size * 4 + tab.size * 4
                        + (w_rpn.size + w_ctr.size + w_wh.size) * 4
                        + n * hw_out * HEAD_PAD * 4))
    return pl.pallas_call(
        kernel,
        out_shape=jax.ShapeDtypeStruct((n, hw_out, HEAD_PAD), jnp.float32),
        grid=(n,),
        in_specs=[
            pl.BlockSpec((None, lf, c), lambda i: (i, 0, 0)),
            pl.BlockSpec((hw_out, HEAD_PAD), lambda i: (0, 0)),
            pl.BlockSpec((8, HEAD_PAD), lambda i: (0, 0)),
            pl.BlockSpec((9 * c, c), lambda i: (0, 0)),
            pl.BlockSpec((1, c), lambda i: (0, 0)),
            pl.BlockSpec((c, HEAD_PAD), lambda i: (0, 0)),
            pl.BlockSpec((1, HEAD_PAD), lambda i: (0, 0)),
            pl.BlockSpec((c, HEAD_PAD), lambda i: (0, 0)),
            pl.BlockSpec((1, HEAD_PAD), lambda i: (0, 0)),
        ],
        out_specs=pl.BlockSpec((None, hw_out, HEAD_PAD), lambda i: (i, 0, 0)),
        compiler_params=pltpu.CompilerParams(
            dimension_semantics=("parallel",)),
        cost_estimate=cost,
    )(feat_flat, ctr_tab, tab, w_rpn, b_rpn, w_ctr, b_ctr, w_wh, b_wh)


# ---------------------------------------------------------------------------
# Plain-JAX glue: NHWC im2col (backbone only)
# ---------------------------------------------------------------------------
def im2col_nhwc(x_nhwc, ksize, stride, pad, pad_value=None):
    """NHWC -> (N*Ho*Wo, k*k*C). Rows ordered (n, y, x); cols ordered (ky, kx, c).

    pad_value=None pads with zeros; a per-channel vector pads with that value
    (used to fold normalization into the first conv exactly)."""
    n, h, w, c = x_nhwc.shape
    if pad_value is None:
        xp = jnp.pad(x_nhwc, ((0, 0), (pad, pad), (pad, pad), (0, 0)))
    else:
        xp = jnp.broadcast_to(jnp.asarray(pad_value, x_nhwc.dtype),
                              (n, h + 2 * pad, w + 2 * pad, c))
        xp = xp.at[:, pad:pad + h, pad:pad + w, :].set(x_nhwc)
    ho = (h + 2 * pad - ksize) // stride + 1
    wo = (w + 2 * pad - ksize) // stride + 1
    taps = []
    for dy in range(ksize):
        for dx in range(ksize):
            taps.append(xp[:, dy:dy + stride * ho:stride,
                           dx:dx + stride * wo:stride, :])
    cols = jnp.stack(taps, axis=3).reshape(n * ho * wo, ksize * ksize * c)
    return cols, (ho, wo)


# ---------------------------------------------------------------------------
# ProposalNetwork
# ---------------------------------------------------------------------------
class ProposalNetworkPallas:
    def __init__(self, key):
        k1, k2, k3, k4 = jax.random.split(key, 4)
        s = 0.05
        # backbone: single 3x3 stride-2 conv
        self.bb_w = s * jax.random.normal(k1, (C_FEAT, C_IN, 3, 3), jnp.float32)
        self.bb_b = jnp.zeros((C_FEAT,), jnp.float32)
        # RPN head
        self.rpn_w = s * jax.random.normal(k2, (C_FEAT, C_FEAT, 3, 3), jnp.float32)
        self.rpn_b = jnp.zeros((C_FEAT,), jnp.float32)
        self.obj_w = s * jax.random.normal(k3, (NUM_ANCHORS, C_FEAT, 1, 1), jnp.float32)
        self.obj_b = jnp.zeros((NUM_ANCHORS,), jnp.float32)
        self.delta_w = s * jax.random.normal(
            k4, (NUM_ANCHORS * 4, C_FEAT, 1, 1), jnp.float32)
        self.delta_b = jnp.zeros((NUM_ANCHORS * 4,), jnp.float32)
        self._precompute_matmul_weights()

    # -- weight preprocessing ------------------------------------------------
    def _precompute_matmul_weights(self):
        a = NUM_ANCHORS
        # backbone conv with normalization folded in:
        #   y = W @ ((x - mean)/std) + b  ==  (W/std) @ x + (b + sum(W*(-mean/std)))
        # exact when the raw border padding is the pixel mean (normalized zero).
        scale = 1.0 / PIXEL_STD
        shift = -PIXEL_MEAN / PIXEL_STD
        w_fold = self.bb_w * scale[None, :, None, None]
        b_fold = self.bb_b + jnp.einsum("ockl,c->o", self.bb_w, shift)
        w_mat = w_fold.transpose(2, 3, 1, 0).reshape(9 * C_IN, C_FEAT)   # (27,32)
        w32 = jnp.zeros((K_BB_PAD, C_FEAT), jnp.float32).at[:9 * C_IN].set(w_mat)
        # block-diagonal (128,128) so 4 spatial positions share one matmul row
        w_diag = jnp.zeros((4 * K_BB_PAD, 4 * C_FEAT), jnp.float32)
        for r in range(4):
            w_diag = w_diag.at[r * K_BB_PAD:(r + 1) * K_BB_PAD,
                               r * C_FEAT:(r + 1) * C_FEAT].set(w32)
        self.bb_w_diag = w_diag.astype(jnp.bfloat16)
        self.bb_b_tile = jnp.tile(b_fold, 4).reshape(1, 4 * C_FEAT).astype(jnp.float32)

        # RPN 3x3 conv: rows ordered (dy, dx, c_in); kernel slices tap blocks.
        self.rpn_w_mat = self.rpn_w.transpose(2, 3, 1, 0).reshape(
            9 * C_FEAT, C_FEAT).astype(jnp.float32)
        self.rpn_b2 = self.rpn_b.reshape(1, C_FEAT).astype(jnp.float32)

        # lane-dense fused heads.  Output columns:
        #   [obj(A) | x1(A) | y1(A) | x2(A) | y2(A) | zeros up to 128]
        # "center" head gives obj / dx*size / dy*size at the x/y column groups,
        # "wh" head gives dw / dh logits with log(size) folded into the bias.
        sizes = jnp.asarray(ANCHOR_SIZES, jnp.float32)
        obj_w2 = self.obj_w.reshape(a, C_FEAT)
        dlt_w2 = self.delta_w.reshape(a, 4, C_FEAT)   # (anchor, [dx,dy,dw,dh], C)
        dlt_b2 = self.delta_b.reshape(a, 4)
        w_ctr = jnp.zeros((C_FEAT, HEAD_PAD), jnp.float32)
        b_ctr = jnp.zeros((HEAD_PAD,), jnp.float32)
        w_ctr = w_ctr.at[:, :a].set(obj_w2.T)
        b_ctr = b_ctr.at[:a].set(self.obj_b)
        w_wh = jnp.zeros((C_FEAT, HEAD_PAD), jnp.float32)
        b_wh = jnp.zeros((HEAD_PAD,), jnp.float32)
        for g, coord in ((1, 0), (2, 1), (3, 0), (4, 1)):   # x1,y1,x2,y2 <- dx,dy
            w_ctr = w_ctr.at[:, g * a:(g + 1) * a].set(
                (dlt_w2[:, coord, :] * sizes[:, None]).T)
            b_ctr = b_ctr.at[g * a:(g + 1) * a].set(dlt_b2[:, coord] * sizes)
        for g, coord in ((1, 2), (2, 3), (3, 2), (4, 3)):   # x1,y1,x2,y2 <- dw,dh
            w_wh = w_wh.at[:, g * a:(g + 1) * a].set(dlt_w2[:, coord, :].T)
            b_wh = b_wh.at[g * a:(g + 1) * a].set(dlt_b2[:, coord] + jnp.log(sizes))
        self.w_ctr = w_ctr
        self.b_ctr = b_ctr.reshape(1, HEAD_PAD)
        self.w_wh = w_wh
        self.b_wh = b_wh.reshape(1, HEAD_PAD)

    # -- per-call small tables -------------------------------------------------
    def _decode_tables(self, img_w, img_h):
        a = NUM_ANCHORS
        sizes = jnp.asarray(ANCHOR_SIZES, jnp.float32)
        tab = jnp.zeros((8, HEAD_PAD), jnp.float32)
        for g in (1, 2, 3, 4):
            tab = tab.at[0, g * a:(g + 1) * a].set(SCALE_CLAMP + jnp.log(sizes))
        for g in (1, 3):                       # x columns -> clip to width
            tab = tab.at[1, g * a:(g + 1) * a].set(img_w)
        for g in (2, 4):                       # y columns -> clip to height
            tab = tab.at[1, g * a:(g + 1) * a].set(img_h)
        tab = tab.at[2, a:3 * a].set(-0.5)     # x1/y1
        tab = tab.at[2, 3 * a:5 * a].set(0.5)  # x2/y2
        return tab

    def _center_table(self, hf, wp):
        # per-row anchor centers (rows ordered y*wp + x), no in-kernel div/mod
        a = NUM_ANCHORS
        q = jnp.arange(hf * wp)
        cx = (q % wp).astype(jnp.float32) * float(STRIDE)
        cy = (q // wp).astype(jnp.float32) * float(STRIDE)
        ctr = jnp.zeros((hf * wp, HEAD_PAD), jnp.float32)
        for g, c in ((1, cx), (2, cy), (3, cx), (4, cy)):
            ctr = ctr.at[:, g * a:(g + 1) * a].set(c[:, None])
        return ctr

    # -- forward ---------------------------------------------------------------
    def forward(self, batched_inputs):
        a = NUM_ANCHORS
        # --- image preprocessing ---------------------------------------------
        images = jnp.stack([x["image"] for x in batched_inputs], axis=0)   # NCHW
        images = images.astype(jnp.float32)
        n, _, h, w = images.shape
        images_nhwc = images.transpose(0, 2, 3, 1)          # single boundary transpose

        # --- backbone: 3x3/s2 conv + ReLU (normalization folded into weights) --
        cols_img, (hf, wf) = im2col_nhwc(images_nhwc, 3, STRIDE, 1,
                                         pad_value=PIXEL_MEAN)
        cols32 = jnp.pad(cols_img, ((0, 0), (0, K_BB_PAD - cols_img.shape[1])))
        feat_rows = pallas_backbone_conv(cols32, self.bb_w_diag, self.bb_b_tile)
        feat = feat_rows.reshape(n, hf, wf, C_FEAT)

        # --- flat zero-padded feature map for the in-kernel 3x3 RPN conv -------
        hp, wp = hf + 2, wf + 2
        hw_out = hf * wp
        feat_pad = jnp.pad(feat, ((0, 0), (1, 1), (1, 1), (0, 0)))
        lf = max(hp * wp, pl.cdiv(hw_out + 2 * wp + 2, 8) * 8)   # slack for shifts
        feat_flat = feat_pad.reshape(n, hp * wp, C_FEAT)
        feat_flat = jnp.pad(feat_flat, ((0, 0), (0, lf - hp * wp), (0, 0)))

        ctr_tab = self._center_table(hf, wp)
        tab = self._decode_tables(float(w), float(h))

        # --- fused RPN conv + heads + anchor decode/clip ------------------------
        fused = pallas_rpn_fused(feat_flat, ctr_tab, tab, self.rpn_w_mat,
                                 self.rpn_b2, self.w_ctr, self.b_ctr,
                                 self.w_wh, self.b_wh, wp=wp, hw_out=hw_out)
        fused = fused.reshape(n, hf, wp, HEAD_PAD)[:, :, :wf, :]   # drop pad cols

        p = hf * wf * a
        obj = fused[..., :a].reshape(n, p)                       # (N, P)
        boxes = jnp.stack([fused[..., a:2 * a], fused[..., 2 * a:3 * a],
                           fused[..., 3 * a:4 * a], fused[..., 4 * a:5 * a]],
                          axis=-1).reshape(n, p, 4)              # (N, P, 4)

        # --- rank proposals (plain JAX top-k; TODO(synk): NMS omitted) ----------
        processed_results = []
        for i, input_per_image in enumerate(batched_inputs):
            scores_i, idx_i = lax.top_k(obj[i], POST_TOPK)
            boxes_i = boxes[i][idx_i]
            out_h = input_per_image.get("height", h)
            out_w = input_per_image.get("width", w)
            scale_x = out_w / float(w)
            scale_y = out_h / float(h)
            boxes_i = boxes_i * jnp.array(
                [scale_x, scale_y, scale_x, scale_y], dtype=jnp.float32)
            processed_results.append({
                "proposals": {
                    "proposal_boxes": boxes_i,          # (POST_TOPK, 4)
                    "objectness_logits": scores_i,      # (POST_TOPK,)
                }
            })
        return processed_results


# ---------------------------------------------------------------------------
# Main
# ---------------------------------------------------------------------------
if __name__ == "__main__":
    key = jax.random.PRNGKey(0)
    k_model, k_img = jax.random.split(key)
    model = ProposalNetworkPallas(k_model)

    imgs = jax.random.uniform(k_img, (N_IMG, C_IN, H_IN, W_IN),
                              dtype=jnp.float32) * 255.0
    batched_inputs = [{"image": imgs[i], "height": H_IN, "width": W_IN}
                      for i in range(N_IMG)]

    results = model.forward(batched_inputs)
    for r in results:
        jax.block_until_ready(r["proposals"]["proposal_boxes"])
        jax.block_until_ready(r["proposals"]["objectness_logits"])

    assert len(results) == N_IMG
    assert results[0]["proposals"]["proposal_boxes"].shape == (POST_TOPK, 4)
    assert results[0]["proposals"]["objectness_logits"].shape == (POST_TOPK,)
    print("KERNEL_OK")
</pallas_src>

<mosaic_0001>
module attributes {stable_mosaic.version = 11 : i64} {
  func.func @_backbone_matmul_kernel(%arg0: i32, %arg1: memref<64x128xbf16, #tpu.memory_space<vmem>>, %arg2: memref<128x128xbf16, #tpu.memory_space<vmem>>, %arg3: memref<1x128xf32, #tpu.memory_space<vmem>>, %arg4: memref<64x128xf32, #tpu.memory_space<vmem>>) attributes {dimension_semantics = [#tpu.dimension_semantics<parallel>], iteration_bounds = array<i64: 2>, scalar_prefetch = 0 : i64, scratch_operands = 0 : i64, tpu.core_type = #tpu.core_type<tc>, window_params = [{transform_indices = @transform_0, window_bounds = array<i64: 64, 128>}, {pipeline_mode = #tpu.pipeline_mode<synchronous>, transform_indices = @transform_1, window_bounds = array<i64: 128, 128>}, {pipeline_mode = #tpu.pipeline_mode<synchronous>, transform_indices = @transform_2, window_bounds = array<i64: 1, 128>}, {transform_indices = @transform_3, window_bounds = array<i64: 64, 128>}]} {
    %c0 = arith.constant 0 : index
    %c0_0 = arith.constant 0 : index
    %0 = vector.load %arg1[%c0, %c0_0] : memref<64x128xbf16, #tpu.memory_space<vmem>>, vector<64x128xbf16>
    %c0_1 = arith.constant 0 : index
    %c0_2 = arith.constant 0 : index
    %1 = vector.load %arg2[%c0_1, %c0_2] : memref<128x128xbf16, #tpu.memory_space<vmem>>, vector<128x128xbf16>
    %cst = arith.constant dense<0.000000e+00> : vector<64x128xf32>
    %2 = tpu.matmul %0, %1, %cst {dimension_numbers = #tpu.dot_dimension_numbers<[1], [0], [0], [1], [0, 0, 1, 1], [], []>} : vector<64x128xbf16>, vector<128x128xbf16>, vector<64x128xf32> -> vector<64x128xf32>
    %c0_3 = arith.constant 0 : index
    %c0_4 = arith.constant 0 : index
    %3 = vector.load %arg3[%c0_3, %c0_4] : memref<1x128xf32, #tpu.memory_space<vmem>>, vector<1x128xf32>
    %4 = vector.broadcast %3 : vector<1x128xf32> to vector<64x128xf32>
    %5 = arith.addf %2, %4 : vector<64x128xf32>
    %cst_5 = arith.constant 0.000000e+00 : f32
    %6 = vector.broadcast %cst_5 : f32 to vector<64x128xf32>
    %7 = arith.maximumf %5, %6 : vector<64x128xf32>
    %c0_6 = arith.constant 0 : index
    %c0_7 = arith.constant 0 : index
    %8 = vector.load %arg4[%c0_6, %c0_7] : memref<64x128xf32, #tpu.memory_space<vmem>>, vector<64x128xf32>
    tpu.vector_store %arg4[%c0_6, %c0_7], %7 {strides = array<i32>} : memref<64x128xf32, #tpu.memory_space<vmem>>, vector<64x128xf32>,
    return
  }
  func.func @transform_0(%arg0: i32) -> (i32, i32) {
    %c0_i32 = arith.constant 0 : i32
    %c0_i32_0 = arith.constant 0 : i32
    return %arg0, %c0_i32 : i32, i32
  }
  func.func @transform_1(%arg0: i32) -> (i32, i32) {
    %c0_i32 = arith.constant 0 : i32
    %c0_i32_0 = arith.constant 0 : i32
    %c0_i32_1 = arith.constant 0 : i32
    return %c0_i32, %c0_i32_0 : i32, i32
  }
  func.func @transform_2(%arg0: i32) -> (i32, i32) {
    %c0_i32 = arith.constant 0 : i32
    %c0_i32_0 = arith.constant 0 : i32
    %c0_i32_1 = arith.constant 0 : i32
    return %c0_i32, %c0_i32_0 : i32, i32
  }
  func.func @transform_3(%arg0: i32) -> (i32, i32) {
    %c0_i32 = arith.constant 0 : i32
    %c0_i32_0 = arith.constant 0 : i32
    return %arg0, %c0_i32 : i32, i32
  }
}

</mosaic_0001>

<llo_original>
// kernel: tpu_custom_call.1
$region0: #{tpu_custom_call.1}
  #allocation0 [shape = 'u32[]', space=smem, size = 0x4, offset = 0x4, fixed_abs, tag = 'smem constant byte address 0x4 - core index']
  #allocation1 [shape = 'u32[144,128]{1,0:T(1,128)}', space=vmem, size = 0x12000, scoped, tag = 'internal scratch']
  %s0 = inlined_call_operand.hbm [shape: bf16[128,128], index: 0, kind: input, shape index: {}]
  %s1 = inlined_call_operand.hbm [shape: bf16[128,128], index: 1, kind: input, shape index: {}]
  %s2 = inlined_call_operand.vmem [shape: f32[1,128], index: 2, kind: input, shape index: {}]
  %s3 = inlined_call_operand.hbm [shape: f32[128,128], index: 3, kind: output, shape index: {}]
  %s4 = sld [smem:[#allocation0]]
  $region53: #{tpu_custom_call.1} parent=0
    _
  %s6 = ssub.s32 1, %s4
  %s7 = scalar_select 0, %s6, %s4
  $region1: #{tpu_custom_call.1} parent=0
    #allocation2 [shape = 'u8[32768]{0}', space=vmem, size = 0x8000, scoped, tag = 'input window, operand 0']
    #allocation3 [shape = 's32[2]{0}', space=sflag, size = 0x8, scoped, tag = 'scoped memory for tpu_custom_call.1']
    #allocation4 [shape = 's32[2]{0}', space=sflag, size = 0x8, scoped, tag = 'scoped memory for tpu_custom_call.1']
    #allocation5 [shape = 'u8[32768]{0}', space=vmem, size = 0x8000, scoped, tag = 'input window, operand 1, single buffered']
    #allocation6 [shape = 's32[1]{0}', space=sflag, size = 0x4, scoped, tag = 'scoped memory for tpu_custom_call.1']
    #allocation7 [shape = 'u8[65536]{0}', space=vmem, size = 0x10000, scoped, tag = 'output window, operand 0']
    %8 = vsyncpa [#allocation3], 0
    %s9 = scalar_lea.sflag [#allocation3], 1
    %10 = vsyncpa %s9, 0
    %11 = vsyncpa [#allocation6], 0
    %12 = vsyncpa [#allocation4], 0
    %s13 = scalar_lea.sflag [#allocation4], 1
    %14 = vsyncpa %s13, 0
    loop: start=0, step=1, limit=4
    $region2: #{tpu_custom_call.1} parent=1 // loop_pre_header
      _
    $region3: #{tpu_custom_call.1} parent=1 // loop_header
      %s16 = sphi 0, %s20
      %p17 = scmp.ge.s32.totalorder %s16, 4
      %s26 = sphi 0, %s28
      %s29 = sphi 0, %s26
      %s30 = sphi 0, %s29
      %s46 = sphi 0, %s30
      %s50 = sphi 0, %s50
      %s52 = sphi 0, %s50
      %s53 = sphi 0, %s52
      %s67 = sphi 0, %s53
      %s71 = sphi 0, %s71
      %s73 = sphi 0, %s71
      %s74 = sphi 0, %s73
      %s88 = sphi 0, %s74
      %s94 = sphi 0, %s96
      %s97 = sphi 0, %s94
      %s98 = sphi 0, %s97
      %s114 = sphi 0, %s98
    $region4: #{tpu_custom_call.1} parent=1 // loop_header_branch
      %19 = sbr.rel (%p17) target = $region8
    $region5: #{tpu_custom_call.1} parent=1 // loop_body
      %s21 = ssub.s32 %s16, 1
      %s22 = ssub.s32 %s16, 2
      %s23 = sadd.s32 %s16, 1
      %s24 = ssub.s32 %s16, %s23
      %p25 = scmp.eq.s32.totalorder %s24, 0
      %s27 = sadd.s32 %s26, 1
      %s28 = scalar_select %p25, %s26, %s27
      %p31 = pneg %p25
      %p32 = scmp.eq.s32.totalorder %s16, 1
      %p33 = por %p31, %p32
      %p34 = scmp.ne.s32.totalorder %s26, %s29
      %p35 = scmp.eq.s32.totalorder %s16, 0
      %p36 = por %p34, %p35
      %p37 = scmp.ne.s32.totalorder %s26, %s29
      %p38 = scmp.eq.s32.totalorder %s21, 1
      %p39 = por %p37, %p38
      %p40 = scmp.ne.s32.totalorder %s29, %s30
      %p41 = scmp.eq.s32.totalorder %s21, 0
      %p42 = por %p40, %p41
      %p43 = scmp.ne.s32.totalorder %s29, %s30
      %p44 = scmp.eq.s32.totalorder %s22, 1
      %p45 = por %p43, %p44
      %p47 = scmp.ne.s32.totalorder %s30, %s46
      %p48 = scmp.eq.s32.totalorder %s22, 0
      %p49 = por %p47, %p48
      %s51 = sadd.s32 %s50, 1
      %p54 = scmp.eq.s32.totalorder %s16, 1
      %p55 = scmp.ne.s32.totalorder %s50, %s52
      %p56 = scmp.eq.s32.totalorder %s16, 0
      %p57 = por %p55, %p56
      %p58 = scmp.ne.s32.totalorder %s50, %s52
      %p59 = scmp.eq.s32.totalorder %s21, 1
      %p60 = por %p58, %p59
      %p61 = scmp.ne.s32.totalorder %s52, %s53
      %p62 = scmp.eq.s32.totalorder %s21, 0
      %p63 = por %p61, %p62
      %p64 = scmp.ne.s32.totalorder %s52, %s53
      %p65 = scmp.eq.s32.totalorder %s22, 1
      %p66 = por %p64, %p65
      %p68 = scmp.ne.s32.totalorder %s53, %s67
      %p69 = scmp.eq.s32.totalorder %s22, 0
      %p70 = por %p68, %p69
      %s72 = sadd.s32 %s71, 1
      %p75 = scmp.eq.s32.totalorder %s16, 1
      %p76 = scmp.ne.s32.totalorder %s71, %s73
      %p77 = scmp.eq.s32.totalorder %s16, 0
      %p78 = por %p76, %p77
      %p79 = scmp.ne.s32.totalorder %s71, %s73
      %p80 = scmp.eq.s32.totalorder %s21, 1
      %p81 = por %p79, %p80
      %p82 = scmp.ne.s32.totalorder %s73, %s74
      %p83 = scmp.eq.s32.totalorder %s21, 0
      %p84 = por %p82, %p83
      %p85 = scmp.ne.s32.totalorder %s73, %s74
      %p86 = scmp.eq.s32.totalorder %s22, 1
      %p87 = por %p85, %p86
      %p89 = scmp.ne.s32.totalorder %s74, %s88
      %p90 = scmp.eq.s32.totalorder %s22, 0
      %p91 = por %p89, %p90
      %s92 = ssub.s32 %s16, %s23
      %p93 = scmp.eq.s32.totalorder %s92, 0
      %s95 = sadd.s32 %s94, 1
      %s96 = scalar_select %p93, %s94, %s95
      %p99 = pneg %p93
      %p100 = scmp.eq.s32.totalorder %s16, 1
      %p101 = por %p99, %p100
      %p102 = scmp.ne.s32.totalorder %s94, %s97
      %p103 = scmp.eq.s32.totalorder %s16, 0
      %p104 = por %p102, %p103
      %p105 = scmp.ne.s32.totalorder %s94, %s97
      %p106 = scmp.eq.s32.totalorder %s21, 1
      %p107 = por %p105, %p106
      %p108 = scmp.ne.s32.totalorder %s97, %s98
      %p109 = scmp.eq.s32.totalorder %s21, 0
      %p110 = por %p108, %p109
      %p111 = scmp.ne.s32.totalorder %s97, %s98
      %p112 = scmp.eq.s32.totalorder %s22, 1
      %p113 = por %p111, %p112
      %p115 = scmp.ne.s32.totalorder %s98, %s114
      %p116 = scmp.eq.s32.totalorder %s22, 0
      %p117 = por %p115, %p116
      %p118 = scmp.le.s32.totalorder 1, %s16
      %p119 = scmp.lt.s32.totalorder %s16, 3
      %p120 = pnand %p118, %p119
      %p121 = pneg %p120
      // Predicated region
      $region9: #{tpu_custom_call.1} parent=5 // pred_check
        _
      $region10: #{tpu_custom_call.1} parent=5 // pred_check_branch
        %123 = sbr.rel (%p120) target = $region12
      $region11: #{tpu_custom_call.1} parent=5 // pred_region
        %s124 = ssub.s32 %s16, 1
        // Predicated region
        $region13: #{tpu_custom_call.1} parent=11 // pred_check
          %p125 = pneg %p63
        $region14: #{tpu_custom_call.1} parent=11 // pred_check_branch
          %127 = sbr.rel (%p125) target = $region16
        $region15: #{tpu_custom_call.1} parent=11 // pred_region
          %s129 = ssub.s32 1024, 1024
          %130 = vsyncadd [#allocation6], %s129
          %s131 = sshll.u32 [#allocation5], 4
          %s132 = int_to_ptr.vmem [resolvable:$true] %s131
          %137 = dma.hbm_to_vmem [thread:$0]  %s1, 1024, %s132, [#allocation6], 64, 64, 4
        $region16: #{tpu_custom_call.1} parent=11 // pred_fallthru
          _
        // Predicated region
        $region17: #{tpu_custom_call.1} parent=11 // pred_check
          %p138 = pneg %p84
        $region18: #{tpu_custom_call.1} parent=11 // pred_check_branch
          %140 = sbr.rel (%p138) target = $region20
        $region19: #{tpu_custom_call.1} parent=11 // pred_region
          _
        $region20: #{tpu_custom_call.1} parent=11 // pred_fallthru
          _
      $region12: #{tpu_custom_call.1} parent=5 // pred_fallthru
        _
      %p141 = scmp.lt.s32.totalorder %s16, 2
      // Predicated region
      $region21: #{tpu_custom_call.1} parent=5 // pred_check
        %p142 = pneg %p141
      $region22: #{tpu_custom_call.1} parent=5 // pred_check_branch
        %144 = sbr.rel (%p142) target = $region24
      $region23: #{tpu_custom_call.1} parent=5 // pred_region
        // Predicated region
        $region25: #{tpu_custom_call.1} parent=23 // pred_check
          %p145 = pneg %p36
        $region26: #{tpu_custom_call.1} parent=23 // pred_check_branch
          %147 = sbr.rel (%p145) target = $region28
        $region27: #{tpu_custom_call.1} parent=23 // pred_region
          %s148 = sand.u32 %s26, 1
          %s149 = scalar_lea.sflag [#allocation3], %s148
          %s150 = sand.u32 %s26, 1
          %s151 = smul.addr %s150, 32
          %s152 = scalar_lea.vmem [#allocation2], %s151
          %s153 = smul.u32 8, %s16
          %s155 = ssub.s32 512, 512
          %156 = vsyncadd %s149, %s155
          %s157 = smul.addr %s153, 64
          %s158 = scalar_lea.hbm %s0, %s157
          %s159 = sshll.u32 %s152, 4
          %s160 = int_to_ptr.vmem [resolvable:$true] %s159
          %165 = dma.hbm_to_vmem [thread:$0]  %s158, 512, %s160, %s149, 64, 64, 4
        $region28: #{tpu_custom_call.1} parent=23 // pred_fallthru
          _
      $region24: #{tpu_custom_call.1} parent=5 // pred_fallthru
        _
      %p166 = scmp.le.s32.totalorder 1, %s16
      %p167 = scmp.lt.s32.totalorder %s16, 3
      %p168 = pnand %p166, %p167
      %p169 = pneg %p168
      // Predicated region
      $region29: #{tpu_custom_call.1} parent=5 // pred_check
        _
      $region30: #{tpu_custom_call.1} parent=5 // pred_check_branch
        %171 = sbr.rel (%p168) target = $region32
      $region31: #{tpu_custom_call.1} parent=5 // pred_region
        %s172 = ssub.s32 %s16, 1
        %s173 = sand.u32 %s29, 1
        %s174 = scalar_lea.sflag [#allocation3], %s173
        %s175 = sand.u32 %s29, 1
        %s176 = smul.addr %s175, 32
        %s177 = scalar_lea.vmem [#allocation2], %s176
        // Predicated region
        $region33: #{tpu_custom_call.1} parent=31 // pred_check
          %p178 = pneg %p42
        $region34: #{tpu_custom_call.1} parent=31 // pred_check_branch
          %180 = sbr.rel (%p178) target = $region36
        $region35: #{tpu_custom_call.1} parent=31 // pred_region
          %181 = dma.done %s174, 512
        $region36: #{tpu_custom_call.1} parent=31 // pred_fallthru
          _
        // Predicated region
        $region37: #{tpu_custom_call.1} parent=31 // pred_check
          %p182 = pneg %p63
        $region38: #{tpu_custom_call.1} parent=31 // pred_check_branch
          %184 = sbr.rel (%p182) target = $region40
        $region39: #{tpu_custom_call.1} parent=31 // pred_region
          %185 = dma.done [#allocation6], 1024
        $region40: #{tpu_custom_call.1} parent=31 // pred_fallthru
          _
        %s186 = sand.u32 %s29, 1
        %s187 = scalar_lea.sflag [#allocation3], %s186
        %s188 = sand.u32 %s29, 1
        %s189 = smul.addr %s188, 32
        %s190 = scalar_lea.vmem [#allocation2], %s189
        %p191 = pneg %p42
        %p192 = pneg %p39
        %p193 = pneg %p63
        %p194 = pneg %p60
        %p195 = pneg %p84
        %p196 = pneg %p81
        %p197 = pneg %p110
        %p198 = pneg %p107
        %s199 = sand.u32 %s97, 1
        %s200 = scalar_lea.sflag [#allocation4], %s199
        %s201 = sand.u32 %s97, 1
        %s202 = smul.addr %s201, 64
        %s203 = scalar_lea.vmem [#allocation7], %s202
        %s204 = smul.u32 8, %s21
        %s205 = smul.u32 8, %s21
        %v207 = vld [vmem:[%s177] sm:$0xf]
        %v208 = vld [vmem:[%s177 + $0x4] sm:$0xf]
        %v209 = vld [vmem:[%s177 + $0x8] sm:$0xf]
        %v210 = vld [vmem:[%s177 + $0xc] sm:$0xf]
        %v211 = vld [vmem:[%s177 + $0x10] sm:$0xf]
        %v212 = vld [vmem:[%s177 + $0x14] sm:$0xf]
        %v213 = vld [vmem:[%s177 + $0x18] sm:$0xf]
        %v214 = vld [vmem:[%s177 + $0x1c] sm:$0xf]
        %v215 = vld [vmem:[#allocation5] sm:$0xf]
        %v216 = vld [vmem:[#allocation5 + $0x4] sm:$0xf]
        %v217 = vld [vmem:[#allocation5 + $0x8] sm:$0xf]
        %v218 = vld [vmem:[#allocation5 + $0xc] sm:$0xf]
        %v219 = vld [vmem:[#allocation5 + $0x10] sm:$0xf]
        %v220 = vld [vmem:[#allocation5 + $0x14] sm:$0xf]
        %v221 = vld [vmem:[#allocation5 + $0x18] sm:$0xf]
        %v222 = vld [vmem:[#allocation5 + $0x1c] sm:$0xf]
        %v223 = vld [vmem:[#allocation5 + $0x20] sm:$0xf]
        %v224 = vld [vmem:[#allocation5 + $0x24] sm:$0xf]
        %v225 = vld [vmem:[#allocation5 + $0x28] sm:$0xf]
        %v226 = vld [vmem:[#allocation5 + $0x2c] sm:$0xf]
        %v227 = vld [vmem:[#allocation5 + $0x30] sm:$0xf]
        %v228 = vld [vmem:[#allocation5 + $0x34] sm:$0xf]
        %v229 = vld [vmem:[#allocation5 + $0x38] sm:$0xf]
        %v230 = vld [vmem:[#allocation5 + $0x3c] sm:$0xf]
        %v231 = vld [vmem:[%s2] sm:$0x1]
        %v233 = vlaneseq
        %v234 = vshrl.u32 %v233, 7
        %v235 = vsub.s32 0, %v234
        %v236 = vrot.slane %v231, %v235
        %v246 = vunpack.c.l.b16 %v207
        %v247 = vunpack.c.l.b16 %v208
        %v248 = vunpack.c.l.b16 %v209
        %v249 = vunpack.c.l.b16 %v210
        %v250 = vunpack.c.l.b16 %v211
        %v251 = vunpack.c.l.b16 %v212
        %v252 = vunpack.c.l.b16 %v213
        %v253 = vunpack.c.l.b16 %v214
        %v254 = vpack.c.b16 %v247, %v246
        %v255 = vpack.c.b16 %v249, %v248
        %v256 = vpack.c.b16 %v251, %v250
        %v257 = vpack.c.b16 %v253, %v252
        %v278 = vunpack.c.l.b16 %v215
        %v279 = vunpack.c.l.b16 %v216
        %v280 = vunpack.c.l.b16 %v217
        %v281 = vunpack.c.l.b16 %v218
        %v282 = vunpack.c.l.b16 %v219
        %v283 = vunpack.c.l.b16 %v220
        %v284 = vunpack.c.l.b16 %v221
        %v285 = vunpack.c.l.b16 %v222
        %v286 = vunpack.c.l.b16 %v223
        %v287 = vunpack.c.l.b16 %v224
        %v288 = vunpack.c.l.b16 %v225
        %v289 = vunpack.c.l.b16 %v226
        %v290 = vunpack.c.l.b16 %v227
        %v291 = vunpack.c.l.b16 %v228
        %v292 = vunpack.c.l.b16 %v229
        %v293 = vunpack.c.l.b16 %v230
        %v294 = vpack.c.b16 %v279, %v278
        %v295 = vpack.c.b16 %v281, %v280
        %v296 = vpack.c.b16 %v283, %v282
        %v297 = vpack.c.b16 %v285, %v284
        %v298 = vpack.c.b16 %v287, %v286
        %v299 = vpack.c.b16 %v289, %v288
        %v300 = vpack.c.b16 %v291, %v290
        %v301 = vpack.c.b16 %v293, %v292
        %310 = vmatprep.subr.bf16.mxu0 0
        %311 = vmatpush1.bf16.msra.mxu0 %v294
        %312 = vmatprep.subr.bf16.mxu0 0
        %313 = vmatpush1.bf16.msra.mxu0 %v295
        %314 = vmatprep.subr.bf16.mxu0 0
        %315 = vmatpush1.bf16.msra.mxu0 %v296
        %316 = vmatprep.subr.bf16.mxu0 0
        %317 = vmatpush1.bf16.msra.mxu0 %v297
        %318 = vmatprep.subr.bf16.mxu0 0
        %319 = vmatpush1.bf16.msra.mxu0 %v298
        %320 = vmatprep.subr.bf16.mxu0 0
        %321 = vmatpush1.bf16.msra.mxu0 %v299
        %322 = vmatprep.subr.bf16.mxu0 0
        %323 = vmatpush1.bf16.msra.mxu0 %v300
        %324 = vmatprep.subr.bf16.mxu0 0
        %325 = vmatpush1.bf16.msra.mxu0 %v301
        %326 = vmatprep.subr.bf16.mxu0 0
        %327 = vmatpush1.bf16.msra.mxu0 0
        %328 = vmatprep.subr.bf16.mxu0 0
        %329 = vmatpush1.bf16.msra.mxu0 0
        %330 = vmatprep.subr.bf16.mxu0 0
        %331 = vmatpush1.bf16.msra.mxu0 0
        %332 = vmatprep.subr.bf16.mxu0 0
        %333 = vmatpush1.bf16.msra.mxu0 0
        %334 = vmatprep.subr.bf16.mxu0 0
        %335 = vmatpush1.bf16.msra.mxu0 0
        %336 = vmatprep.subr.bf16.mxu0 0
        %337 = vmatpush1.bf16.msra.mxu0 0
        %338 = vmatprep.subr.bf16.mxu0 0
        %339 = vmatpush1.bf16.msra.mxu0 0
        %340 = vmatprep.subr.bf16.mxu0 0
        %341 = vmatpush1.bf16.msra.mxu0 0
        %342 = vmatprep.mubr.bf16.mxu0 0
        %343 = vmatmul.mubr.bf16.gmra.mrb[0].mxu0 %v254
        %v344 = vpop.f32.mrb[0].mxu0
        %v345 = vadd.f32 %v236, %v344
        %v346 = vpop.f32.mrb[0].mxu0
        %v347 = vpop.f32.mrb[0].mxu0
        %v348 = vadd.f32 %v236, %v347
        %v349 = vpop.f32.mrb[0].mxu0
        %350 = vmatprep.mubr.bf16.mxu0 0
        %351 = vmatmul.mubr.bf16.gmra.mrb[0].mxu0 %v255
        %v352 = vpop.f32.mrb[0].mxu0
        %v353 = vadd.f32 %v236, %v352
        %v354 = vpop.f32.mrb[0].mxu0
        %v355 = vpop.f32.mrb[0].mxu0
        %v356 = vadd.f32 %v236, %v355
        %v357 = vpop.f32.mrb[0].mxu0
        %358 = vmatprep.mubr.bf16.mxu0 0
        %359 = vmatmul.mubr.bf16.gmra.mrb[0].mxu0 %v256
        %v360 = vpop.f32.mrb[0].mxu0
        %v361 = vadd.f32 %v236, %v360
        %v362 = vpop.f32.mrb[0].mxu0
        %v363 = vpop.f32.mrb[0].mxu0
        %v364 = vadd.f32 %v236, %v363
        %v365 = vpop.f32.mrb[0].mxu0
        %366 = vmatprep.mubr.bf16.mxu0 0
        %367 = vmatmul.mubr.bf16.gmra.mrb[0].mxu0 %v257
        %v368 = vpop.f32.mrb[0].mxu0
        %v369 = vadd.f32 %v236, %v368
        %v370 = vpop.f32.mrb[0].mxu0
        %v371 = vpop.f32.mrb[0].mxu0
        %v372 = vadd.f32 %v236, %v371
        %v373 = vpop.f32.mrb[0].mxu0
        %374 = vdwg.mxu0
        %v375 = vmax.f32 %v345, 0.0
        %v376 = vmax.f32 %v348, 0.0
        %v377 = vmax.f32 %v353, 0.0
        %v378 = vmax.f32 %v356, 0.0
        %v379 = vmax.f32 %v361, 0.0
        %v380 = vmax.f32 %v364, 0.0
        %v381 = vmax.f32 %v369, 0.0
        %v382 = vmax.f32 %v372, 0.0
        %383 = vst [vmem:[%s203] sm:$0xff] %v375
        %384 = vst [vmem:[%s203 + $0x8] sm:$0xff] %v376
        %385 = vst [vmem:[%s203 + $0x10] sm:$0xff] %v377
        %386 = vst [vmem:[%s203 + $0x18] sm:$0xff] %v378
        %387 = vst [vmem:[%s203 + $0x20] sm:$0xff] %v379
        %388 = vst [vmem:[%s203 + $0x28] sm:$0xff] %v380
        %389 = vst [vmem:[%s203 + $0x30] sm:$0xff] %v381
        %390 = vst [vmem:[%s203 + $0x38] sm:$0xff] %v382
        %s391 = sand.u32 %s97, 1
        %s392 = scalar_lea.sflag [#allocation4], %s391
        %s393 = sand.u32 %s97, 1
        %s394 = smul.addr %s393, 64
        %s395 = scalar_lea.vmem [#allocation7], %s394
        // Predicated region
        $region41: #{tpu_custom_call.1} parent=31 // pred_check
          %p396 = pneg %p107
        $region42: #{tpu_custom_call.1} parent=31 // pred_check_branch
          %398 = sbr.rel (%p396) target = $region44
        $region43: #{tpu_custom_call.1} parent=31 // pred_region
          %s399 = smul.u32 8, %s21
          %s401 = ssub.s32 1024, 1024
          %402 = vsyncadd %s392, %s401
          %s403 = smul.addr %s399, 128
          %s404 = scalar_lea.hbm %s3, %s403
          %s405 = sshll.u32 %s395, 4
          %s406 = int_to_ptr.vmem [resolvable:$true] %s405
          %411 = dma.vmem_to_hbm [thread:$0]  %s406, 1024, %s404, %s392, 128, 128, 8
        $region44: #{tpu_custom_call.1} parent=31 // pred_fallthru
          _
      $region32: #{tpu_custom_call.1} parent=5 // pred_fallthru
        _
      %p412 = scmp.le.s32.totalorder 2, %s16
      // Predicated region
      $region45: #{tpu_custom_call.1} parent=5 // pred_check
        %p413 = pneg %p412
      $region46: #{tpu_custom_call.1} parent=5 // pred_check_branch
        %415 = sbr.rel (%p413) target = $region48
      $region47: #{tpu_custom_call.1} parent=5 // pred_region
        %s416 = ssub.s32 %s16, 2
        // Predicated region
        $region49: #{tpu_custom_call.1} parent=47 // pred_check
          %p417 = pneg %p113
        $region50: #{tpu_custom_call.1} parent=47 // pred_check_branch
          %419 = sbr.rel (%p417) target = $region52
        $region51: #{tpu_custom_call.1} parent=47 // pred_region
          %s420 = sand.u32 %s98, 1
          %s421 = scalar_lea.sflag [#allocation4], %s420
          %s422 = sand.u32 %s98, 1
          %s423 = smul.addr %s422, 64
          %s424 = scalar_lea.vmem [#allocation7], %s423
          %425 = dma.done %s421, 1024
        $region52: #{tpu_custom_call.1} parent=47 // pred_fallthru
          _
      $region48: #{tpu_custom_call.1} parent=5 // pred_fallthru
        _
    $region6: #{tpu_custom_call.1} parent=1 // loop_footer
      %s20 = sadd.s32 1, %s16
    $region7: #{tpu_custom_call.1} parent=1 // loop_footer_branch
      %15 = sbr.rel target = $region3
    $region8: #{tpu_custom_call.1} parent=1 // loop_exit
      _
    %426 = vsyncpa [#allocation3], 1
    %s427 = scalar_lea.sflag [#allocation3], 1
    %428 = vsyncpa %s427, 1
    %429 = vsyncpa [#allocation6], 1
    %430 = vsyncpa [#allocation4], 1
    %s431 = scalar_lea.sflag [#allocation4], 1
    %432 = vsyncpa %s431, 1

</llo_original>
